<compile_context>
chip_gen: v5e
topology: v5e:2x2
jax: 0.10.0
libtpu: 0.0.40
codegen_flags: <defaults>
</compile_context>

<pallas_src>
import functools

import jax
import jax.numpy as jnp
from jax import lax
from jax.experimental import pallas as pl
from jax.experimental.pallas import tpu as pltpu

_NEG_BIG = -1.0e30  # finite "minus infinity" so masking never produces NaNs


def _round_up(x: int, m: int) -> int:
    return (x + m - 1) // m * m


def _categorical_kernel(x_ref, w_ref, t_ref, out_ref, *, n_total, n_labels,
                        block_n):
    i = pl.program_id(0)

    x = x_ref[...]                         # (TN, E)   matmul_dtype
    w = w_ref[...]                         # (E, Lp)   matmul_dtype (pre-transposed)
    start = pl.multiple_of(i * block_n, block_n)
    tgt = t_ref[pl.ds(start, block_n), :]  # (TN, 1)   i32 (resident column)

    tn = x.shape[0]
    lp = w.shape[1]

    # responses = x @ weight.T  == x @ w_t   (MXU, f32 accumulation)
    logits = jnp.dot(x, w, preferred_element_type=jnp.float32)   # (TN, Lp) f32

    lane_ids = lax.broadcasted_iota(jnp.int32, (tn, lp), 1)
    if lp != n_labels:  # mask lane padding of the label axis
        logits = jnp.where(lane_ids < n_labels, logits, _NEG_BIG)

    # target logit via select+max (no (TN,Lp) f32 onehot multiply)
    tgt_logit = jnp.max(jnp.where(lane_ids == tgt, logits, _NEG_BIG),
                        axis=1, keepdims=True)                   # (TN, 1)

    m = jnp.max(logits, axis=1, keepdims=True)                   # (TN, 1)
    sum_exp = jnp.sum(jnp.exp(logits - m), axis=1, keepdims=True)
    # per-row NLL: -(log_softmax)[target] = m + log(sum_exp) - tgt_logit
    row_loss = m + jnp.log(sum_exp) - tgt_logit                  # (TN, 1)

    # rank of the target logit; ties broken by index (stable-argsort semantics)
    beats = (logits > tgt_logit) | ((logits == tgt_logit) & (lane_ids < tgt))
    rank = jnp.sum(beats.astype(jnp.float32), axis=1, keepdims=True)

    # mask batch-padding rows (global row index >= true N)
    row_ids = start + lax.broadcasted_iota(jnp.int32, (tn, 1), 0)
    valid = (row_ids < n_total).astype(jnp.float32)              # (TN, 1)

    # pack the three per-row contributions into lanes 0/1/2 of a lane-dense
    # (TN, 128) tile and reduce over rows once -> (1, 128) per-block partial.
    lane128 = lax.broadcasted_iota(jnp.int32, (tn, 128), 1)
    contrib = jnp.where(
        lane128 == 0, row_loss * valid,
        jnp.where(lane128 == 1, jnp.where(rank < 1.0, valid, 0.0),
                  jnp.where(lane128 == 2, jnp.where(rank < 5.0, valid, 0.0),
                            0.0)))
    partial = jnp.sum(contrib, axis=0, keepdims=True)            # (1, 128)

    # unmasked, lane-dense store of the (1, 8, 128) output tile
    out_ref[...] = jnp.broadcast_to(partial, (1, 8, 128))


def categorical_forward(x, weight, targets, *, block_n=256,
                        matmul_dtype=jnp.bfloat16):
    """x: (N, E), weight: (L, E), targets: (N,) int.

    Returns (loss, (top1, top5)) — scalars, matching tensormonk Categorical
    with loss_type='entr', measure='dot'.
    """
    n, e = x.shape
    l, e_w = weight.shape
    assert e_w == e

    mdt = jnp.dtype(matmul_dtype)
    bpe = mdt.itemsize
    sub = 8 if bpe >= 4 else (16 if bpe == 2 else 32)   # sublane multiple
    lp = _round_up(l, 128)                              # lane-dense label axis

    # generation-aware VMEM budget
    try:
        cap = int(getattr(pltpu.get_tpu_info(), "vmem_capacity_bytes", 0)) or (64 << 20)
    except Exception:  # pragma: no cover - off-TPU fallback
        cap = 64 << 20
    budget = int(cap * 0.70)

    def _estimate(tn_):
        n_pad_ = _round_up(n, tn_)
        return (2 * e * lp * bpe            # resident weight (double-buffered)
                + 2 * tn_ * e * bpe         # double-buffered x tiles
                + 2 * n_pad_ * 128 * 4      # resident (lane-padded) target column
                + 3 * tn_ * lp * 4          # logits tile + temporaries
                + 2 * 8 * 128 * 4)          # output tiles

    # batch tile: multiple of the sublane packing, shrunk until it fits VMEM
    tn = _round_up(min(block_n, _round_up(n, sub)), sub)
    while tn > sub and _estimate(tn) > budget:
        tn = _round_up(tn // 2, sub)
    n_pad = _round_up(n, tn)
    nb = n_pad // tn

    # wrapper-side cast (halves DMA bytes / resident VMEM for bf16) and
    # one-time weight transpose so the MXU RHS is (E, Lp), label axis on lanes.
    x_p = x.astype(mdt)
    if n_pad != n:
        x_p = jnp.pad(x_p, ((0, n_pad - n), (0, 0)))
    w_t = weight.astype(mdt).T                          # (E, L)
    if lp != l:
        w_t = jnp.pad(w_t, ((0, 0), (0, lp - l)))
    t_p = targets.astype(jnp.int32).reshape(n, 1)
    if n_pad != n:
        t_p = jnp.pad(t_p, ((0, n_pad - n), (0, 0)))

    est = _estimate(tn)
    vmem_limit = int(min(max(2 * est, 32 << 20), int(cap * 0.75)))

    cost = pl.CostEstimate(
        flops=2 * n_pad * lp * e + 12 * n_pad * lp,
        transcendentals=n_pad * lp + n_pad,
        bytes_accessed=(n_pad * e + e * lp) * bpe + n_pad * 4 + nb * 8 * 128 * 4,
    )

    kernel = functools.partial(
        _categorical_kernel, n_total=n, n_labels=l, block_n=tn)

    partials = pl.pallas_call(
        kernel,
        out_shape=jax.ShapeDtypeStruct((nb, 8, 128), jnp.float32),
        grid=(nb,),
        in_specs=[
            pl.BlockSpec((tn, e), lambda i: (i, 0)),       # x tile, pipelined
            pl.BlockSpec((e, lp), lambda i: (0, 0)),       # weight, VMEM-resident
            pl.BlockSpec((n_pad, 1), lambda i: (0, 0)),    # targets, resident column
        ],
        out_specs=pl.BlockSpec((1, 8, 128), lambda i: (i, 0, 0)),  # per-block partials
        compiler_params=pltpu.CompilerParams(
            dimension_semantics=("parallel",),             # megacore-shardable
            vmem_limit_bytes=vmem_limit,
        ),
        cost_estimate=cost,
    )(x_p, w_t, t_p)

    p = partials[:, 0, :]                                  # (nb, 128)
    inv_n = 1.0 / float(n)
    loss = jnp.sum(p[:, 0]) * inv_n
    top1 = jnp.sum(p[:, 1]) * (100.0 * inv_n)
    top5 = jnp.sum(p[:, 2]) * (100.0 * inv_n)
    return loss, (top1, top5)


def reference_forward(x, weight, targets):
    logits = x @ weight.T
    logp = jax.nn.log_softmax(logits, axis=1)
    n = x.shape[0]
    loss = -jnp.mean(logp[jnp.arange(n), targets])
    order = jnp.argsort(-logits, axis=1)
    top1 = jnp.mean((order[:, 0] == targets).astype(jnp.float32)) * 100.0
    top5 = jnp.mean(jnp.any(order[:, :5] == targets[:, None],
                            axis=1).astype(jnp.float32)) * 100.0
    return loss, (top1, top5)


if __name__ == "__main__":
    # tensor_size = (1, 32) -> n_embedding = 32 ; n_labels = 16 ; batch = 28
    # (batch deliberately not a multiple of the row tile to exercise the
    #  ragged-tile masking and the multi-block partial-sum path)
    N, E, L = 28, 32, 16
    key = jax.random.PRNGKey(0)
    kx, kw, kt = jax.random.split(key, 3)

    x = jax.random.normal(kx, (N, E), dtype=jnp.float32)
    # weight = F.normalize(randn(n_labels, n_embedding), p=2, dim=1)
    w_raw = jax.random.normal(kw, (L, E), dtype=jnp.float32)
    weight = w_raw / jnp.linalg.norm(w_raw, axis=1, keepdims=True)
    targets = jax.random.randint(kt, (N,), 0, L, dtype=jnp.int32)

    loss_r, (top1_r, top5_r) = reference_forward(x, weight, targets)

    # multi-block grid (4 tiles of 8 rows, ragged last tile), exact f32 matmul
    loss, (top1, top5) = categorical_forward(x, weight, targets, block_n=8,
                                             matmul_dtype=jnp.float32)
    jax.block_until_ready((loss, top1, top5))
    assert jnp.allclose(loss, loss_r, atol=1e-5), (loss, loss_r)
    assert jnp.allclose(top1, top1_r, atol=1e-4), (top1, top1_r)
    assert jnp.allclose(top5, top5_r, atol=1e-4), (top5, top5_r)

    # default tiling (single larger block), exact f32 matmul
    loss_d, (top1_d, top5_d) = categorical_forward(x, weight, targets,
                                                   matmul_dtype=jnp.float32)
    jax.block_until_ready((loss_d, top1_d, top5_d))
    assert jnp.allclose(loss_d, loss_r, atol=1e-5), (loss_d, loss_r)
    assert jnp.allclose(top1_d, top1_r, atol=1e-4), (top1_d, top1_r)
    assert jnp.allclose(top5_d, top5_r, atol=1e-4), (top5_d, top5_r)

    # default bf16 fast path (f32 MXU accumulation) — loose loss check only
    loss_b, (top1_b, top5_b) = categorical_forward(x, weight, targets,
                                                   block_n=16)
    jax.block_until_ready((loss_b, top1_b, top5_b))
    assert jnp.allclose(loss_b, loss_r, rtol=5e-2, atol=5e-2), (loss_b, loss_r)

    print("KERNEL_OK")
</pallas_src>

<mosaic_0001>
module attributes {stable_mosaic.version = 11 : i64} {
  func.func @_categorical_kernel(%arg0: i32, %arg1: memref<8x32xf32, #tpu.memory_space<vmem>>, %arg2: memref<32x128xf32, #tpu.memory_space<vmem>>, %arg3: memref<32x1xi32, #tpu.memory_space<vmem>>, %arg4: memref<1x8x128xf32, #tpu.memory_space<vmem>>) attributes {dimension_semantics = [#tpu.dimension_semantics<parallel>], iteration_bounds = array<i64: 4>, scalar_prefetch = 0 : i64, scratch_operands = 0 : i64, tpu.core_type = #tpu.core_type<tc>, window_params = [{transform_indices = @transform_0, window_bounds = array<i64: 8, 32>}, {pipeline_mode = #tpu.pipeline_mode<synchronous>, transform_indices = @transform_1, window_bounds = array<i64: 32, 128>}, {pipeline_mode = #tpu.pipeline_mode<synchronous>, transform_indices = @transform_2, window_bounds = array<i64: 32, 1>}, {transform_indices = @transform_3, window_bounds = array<i64: 1, 8, 128>}]} {
    %c0 = arith.constant 0 : index
    %c0_0 = arith.constant 0 : index
    %0 = vector.load %arg1[%c0, %c0_0] : memref<8x32xf32, #tpu.memory_space<vmem>>, vector<8x32xf32>
    %c0_1 = arith.constant 0 : index
    %c0_2 = arith.constant 0 : index
    %1 = vector.load %arg2[%c0_1, %c0_2] : memref<32x128xf32, #tpu.memory_space<vmem>>, vector<32x128xf32>
    %c8_i32 = arith.constant 8 : i32
    %2 = arith.muli %arg0, %c8_i32 : i32
    %3 = tpu.assume_multiple %2, 8 : i32
    %4 = arith.index_cast %3 : i32 to index
    %c0_3 = arith.constant 0 : index
    %5 = vector.load %arg3[%4, %c0_3] : memref<32x1xi32, #tpu.memory_space<vmem>>, vector<8x1xi32>
    %cst = arith.constant dense<0.000000e+00> : vector<8x128xf32>
    %6 = tpu.matmul %0, %1, %cst {dimension_numbers = #tpu.dot_dimension_numbers<[1], [0], [0], [1], [0, 0, 1, 1], [], []>} : vector<8x32xf32>, vector<32x128xf32>, vector<8x128xf32> -> vector<8x128xf32>
    %7 = tpu.iota {dimensions = array<i32: 1>} : vector<8x128xi32>
    %c16_i32 = arith.constant 16 : i32
    %8 = vector.broadcast %c16_i32 : i32 to vector<8x128xi32>
    %9 = arith.cmpi slt, %7, %8 : vector<8x128xi32>
    %cst_4 = arith.constant -1.000000e+30 : f32
    %10 = vector.broadcast %cst_4 : f32 to vector<8x128xf32>
    %11 = arith.select %9, %6, %10 : vector<8x128xi1>, vector<8x128xf32>
    %12 = vector.broadcast %5 : vector<8x1xi32> to vector<8x128xi32>
    %13 = arith.cmpi eq, %7, %12 : vector<8x128xi32>
    %cst_5 = arith.constant -1.000000e+30 : f32
    %14 = vector.broadcast %cst_5 : f32 to vector<8x128xf32>
    %15 = arith.select %13, %11, %14 : vector<8x128xi1>, vector<8x128xf32>
    %cst_6 = arith.constant dense<0xFF800000> : vector<8xf32>
    %16 = vector.multi_reduction <maximumf>, %15, %cst_6 [1] : vector<8x128xf32> to vector<8xf32>
    %17 = vector.shape_cast %16 : vector<8xf32> to vector<8x1xf32>
    %cst_7 = arith.constant dense<0xFF800000> : vector<8xf32>
    %18 = vector.multi_reduction <maximumf>, %11, %cst_7 [1] : vector<8x128xf32> to vector<8xf32>
    %19 = vector.shape_cast %18 : vector<8xf32> to vector<8x1xf32>
    %20 = vector.broadcast %19 : vector<8x1xf32> to vector<8x128xf32>
    %21 = arith.subf %11, %20 : vector<8x128xf32>
    %22 = math.exp %21 : vector<8x128xf32>
    %cst_8 = arith.constant dense<0.000000e+00> : vector<8xf32>
    %23 = vector.multi_reduction <add>, %22, %cst_8 [1] : vector<8x128xf32> to vector<8xf32>
    %24 = vector.shape_cast %23 : vector<8xf32> to vector<8x1xf32>
    %25 = math.log %24 : vector<8x1xf32>
    %26 = arith.addf %19, %25 : vector<8x1xf32>
    %27 = arith.subf %26, %17 : vector<8x1xf32>
    %28 = vector.broadcast %17 : vector<8x1xf32> to vector<8x128xf32>
    %29 = arith.cmpf ogt, %11, %28 : vector<8x128xf32>
    %30 = vector.broadcast %17 : vector<8x1xf32> to vector<8x128xf32>
    %31 = arith.cmpf oeq, %11, %30 : vector<8x128xf32>
    %32 = vector.broadcast %5 : vector<8x1xi32> to vector<8x128xi32>
    %33 = arith.cmpi slt, %7, %32 : vector<8x128xi32>
    %34 = arith.andi %31, %33 : vector<8x128xi1>
    %35 = arith.ori %29, %34 : vector<8x128xi1>
    %36 = arith.extui %35 : vector<8x128xi1> to vector<8x128xi32>
    %37 = arith.sitofp %36 : vector<8x128xi32> to vector<8x128xf32>
    %cst_9 = arith.constant dense<0.000000e+00> : vector<8xf32>
    %38 = vector.multi_reduction <add>, %37, %cst_9 [1] : vector<8x128xf32> to vector<8xf32>
    %39 = vector.shape_cast %38 : vector<8xf32> to vector<8x1xf32>
    %40 = tpu.iota {dimensions = array<i32: 0>} : vector<8x1xi32>
    %41 = vector.broadcast %3 : i32 to vector<8x1xi32>
    %42 = arith.addi %41, %40 : vector<8x1xi32>
    %c28_i32 = arith.constant 28 : i32
    %43 = vector.broadcast %c28_i32 : i32 to vector<8x1xi32>
    %44 = arith.cmpi slt, %42, %43 : vector<8x1xi32>
    %45 = arith.extui %44 : vector<8x1xi1> to vector<8x1xi32>
    %46 = arith.sitofp %45 : vector<8x1xi32> to vector<8x1xf32>
    %47 = tpu.iota {dimensions = array<i32: 1>} : vector<8x128xi32>
    %c0_i32 = arith.constant 0 : i32
    %48 = vector.broadcast %c0_i32 : i32 to vector<8x128xi32>
    %49 = arith.cmpi eq, %47, %48 : vector<8x128xi32>
    %50 = arith.mulf %27, %46 : vector<8x1xf32>
    %c1_i32 = arith.constant 1 : i32
    %51 = vector.broadcast %c1_i32 : i32 to vector<8x128xi32>
    %52 = arith.cmpi eq, %47, %51 : vector<8x128xi32>
    %cst_10 = arith.constant 1.000000e+00 : f32
    %53 = vector.broadcast %cst_10 : f32 to vector<8x1xf32>
    %54 = arith.cmpf olt, %39, %53 : vector<8x1xf32>
    %cst_11 = arith.constant 0.000000e+00 : f32
    %55 = vector.broadcast %cst_11 : f32 to vector<8x1xf32>
    %56 = arith.select %54, %46, %55 : vector<8x1xi1>, vector<8x1xf32>
    %c2_i32 = arith.constant 2 : i32
    %57 = vector.broadcast %c2_i32 : i32 to vector<8x128xi32>
    %58 = arith.cmpi eq, %47, %57 : vector<8x128xi32>
    %cst_12 = arith.constant 5.000000e+00 : f32
    %59 = vector.broadcast %cst_12 : f32 to vector<8x1xf32>
    %60 = arith.cmpf olt, %39, %59 : vector<8x1xf32>
    %cst_13 = arith.constant 0.000000e+00 : f32
    %61 = vector.broadcast %cst_13 : f32 to vector<8x1xf32>
    %62 = arith.select %60, %46, %61 : vector<8x1xi1>, vector<8x1xf32>
    %cst_14 = arith.constant 0.000000e+00 : f32
    %63 = vector.shape_cast %62 : vector<8x1xf32> to vector<8x1xf32>
    %64 = vector.broadcast %63 : vector<8x1xf32> to vector<8x128xf32>
    %65 = vector.broadcast %cst_14 : f32 to vector<8x128xf32>
    %66 = arith.select %58, %64, %65 : vector<8x128xi1>, vector<8x128xf32>
    %67 = vector.shape_cast %56 : vector<8x1xf32> to vector<8x1xf32>
    %68 = vector.broadcast %67 : vector<8x1xf32> to vector<8x128xf32>
    %69 = arith.select %52, %68, %66 : vector<8x128xi1>, vector<8x128xf32>
    %70 = vector.shape_cast %50 : vector<8x1xf32> to vector<8x1xf32>
    %71 = vector.broadcast %70 : vector<8x1xf32> to vector<8x128xf32>
    %72 = arith.select %49, %71, %69 : vector<8x128xi1>, vector<8x128xf32>
    %cst_15 = arith.constant dense<0.000000e+00> : vector<128xf32>
    %73 = vector.multi_reduction <add>, %72, %cst_15 [0] : vector<8x128xf32> to vector<128xf32>
    %74 = vector.shape_cast %73 : vector<128xf32> to vector<1x128xf32>
    %75 = vector.shape_cast %74 : vector<1x128xf32> to vector<1x1x128xf32>
    %76 = vector.broadcast %75 : vector<1x1x128xf32> to vector<1x8x128xf32>
    %c0_16 = arith.constant 0 : index
    %c0_17 = arith.constant 0 : index
    %c0_18 = arith.constant 0 : index
    %77 = vector.load %arg4[%c0_16, %c0_17, %c0_18] : memref<1x8x128xf32, #tpu.memory_space<vmem>>, vector<1x8x128xf32>
    tpu.vector_store %arg4[%c0_16, %c0_17, %c0_18], %76 {strides = array<i32>} : memref<1x8x128xf32, #tpu.memory_space<vmem>>, vector<1x8x128xf32>,
    return
  }
  func.func @transform_0(%arg0: i32) -> (i32, i32) {
    %c0_i32 = arith.constant 0 : i32
    %c0_i32_0 = arith.constant 0 : i32
    return %arg0, %c0_i32 : i32, i32
  }
  func.func @transform_1(%arg0: i32) -> (i32, i32) {
    %c0_i32 = arith.constant 0 : i32
    %c0_i32_0 = arith.constant 0 : i32
    %c0_i32_1 = arith.constant 0 : i32
    return %c0_i32, %c0_i32_0 : i32, i32
  }
  func.func @transform_2(%arg0: i32) -> (i32, i32) {
    %c0_i32 = arith.constant 0 : i32
    %c0_i32_0 = arith.constant 0 : i32
    %c0_i32_1 = arith.constant 0 : i32
    return %c0_i32, %c0_i32_0 : i32, i32
  }
  func.func @transform_3(%arg0: i32) -> (i32, i32, i32) {
    %c0_i32 = arith.constant 0 : i32
    %c0_i32_0 = arith.constant 0 : i32
    %c0_i32_1 = arith.constant 0 : i32
    return %arg0, %c0_i32, %c0_i32_0 : i32, i32, i32
  }
}

</mosaic_0001>

<llo_original>
// kernel: tpu_custom_call.1
$region0: #{tpu_custom_call.1}
  #allocation0 [shape = 'u32[]', space=smem, size = 0x4, offset = 0x4, fixed_abs, tag = 'smem constant byte address 0x4 - core index']
  #allocation1 [shape = 'u32[72,128]{1,0:T(1,128)}', space=vmem, size = 0x9000, scoped, tag = 'internal scratch']
  %s0 = inlined_call_operand.vmem [shape: f32[32,32], index: 0, kind: input, shape index: {}]
  %s1 = inlined_call_operand.hbm [shape: f32[32,128], index: 1, kind: input, shape index: {}]
  %s2 = inlined_call_operand.vmem [shape: s32[32,1], index: 2, kind: input, shape index: {}]
  %s3 = inlined_call_operand.hbm [shape: f32[4,8,128], index: 3, kind: output, shape index: {}]
  %s4 = sld [smem:[#allocation0]]
  $region49: #{tpu_custom_call.1} parent=0
    _
  %s6 = ssub.s32 1, %s4
  %s7 = scalar_select 0, %s6, %s4
  $region1: #{tpu_custom_call.1} parent=0
    #allocation2 [shape = 'u8[16384]{0}', space=vmem, size = 0x4000, scoped, tag = 'input window, operand 1, single buffered']
    #allocation3 [shape = 's32[2]{0}', space=sflag, size = 0x8, scoped, tag = 'scoped memory for tpu_custom_call.1']
    #allocation4 [shape = 's32[2]{0}', space=sflag, size = 0x8, scoped, tag = 'scoped memory for tpu_custom_call.1']
    #allocation5 [shape = 'u8[8192]{0}', space=vmem, size = 0x2000, scoped, tag = 'output window, operand 0']
    %8 = vsyncpa [#allocation3], 0
    %9 = vsyncpa [#allocation4], 0
    %s10 = scalar_lea.sflag [#allocation4], 1
    %11 = vsyncpa %s10, 0
    loop: start=0, step=1, limit=6
    $region2: #{tpu_custom_call.1} parent=1 // loop_pre_header
      _
    $region3: #{tpu_custom_call.1} parent=1 // loop_header
      %s13 = sphi 0, %s17
      %p14 = scmp.ge.s32.totalorder %s13, 6
      %s23 = sphi 0, %s25
      %s26 = sphi 0, %s23
      %s27 = sphi 0, %s26
      %s43 = sphi 0, %s27
      %s47 = sphi 0, %s47
      %s49 = sphi 0, %s47
      %s50 = sphi 0, %s49
      %s64 = sphi 0, %s50
      %s68 = sphi 0, %s68
      %s70 = sphi 0, %s68
      %s71 = sphi 0, %s70
      %s85 = sphi 0, %s71
      %s91 = sphi 0, %s93
      %s94 = sphi 0, %s91
      %s95 = sphi 0, %s94
      %s111 = sphi 0, %s95
    $region4: #{tpu_custom_call.1} parent=1 // loop_header_branch
      %16 = sbr.rel (%p14) target = $region8
    $region5: #{tpu_custom_call.1} parent=1 // loop_body
      %s18 = ssub.s32 %s13, 1
      %s19 = ssub.s32 %s13, 2
      %s20 = sadd.s32 %s13, 1
      %s21 = ssub.s32 %s13, %s20
      %p22 = scmp.eq.s32.totalorder %s21, 0
      %s24 = sadd.s32 %s23, 1
      %s25 = scalar_select %p22, %s23, %s24
      %p28 = pneg %p22
      %p29 = scmp.eq.s32.totalorder %s13, 3
      %p30 = por %p28, %p29
      %p31 = scmp.ne.s32.totalorder %s23, %s26
      %p32 = scmp.eq.s32.totalorder %s13, 0
      %p33 = por %p31, %p32
      %p34 = scmp.ne.s32.totalorder %s23, %s26
      %p35 = scmp.eq.s32.totalorder %s18, 3
      %p36 = por %p34, %p35
      %p37 = scmp.ne.s32.totalorder %s26, %s27
      %p38 = scmp.eq.s32.totalorder %s18, 0
      %p39 = por %p37, %p38
      %p40 = scmp.ne.s32.totalorder %s26, %s27
      %p41 = scmp.eq.s32.totalorder %s19, 3
      %p42 = por %p40, %p41
      %p44 = scmp.ne.s32.totalorder %s27, %s43
      %p45 = scmp.eq.s32.totalorder %s19, 0
      %p46 = por %p44, %p45
      %s48 = sadd.s32 %s47, 1
      %p51 = scmp.eq.s32.totalorder %s13, 3
      %p52 = scmp.ne.s32.totalorder %s47, %s49
      %p53 = scmp.eq.s32.totalorder %s13, 0
      %p54 = por %p52, %p53
      %p55 = scmp.ne.s32.totalorder %s47, %s49
      %p56 = scmp.eq.s32.totalorder %s18, 3
      %p57 = por %p55, %p56
      %p58 = scmp.ne.s32.totalorder %s49, %s50
      %p59 = scmp.eq.s32.totalorder %s18, 0
      %p60 = por %p58, %p59
      %p61 = scmp.ne.s32.totalorder %s49, %s50
      %p62 = scmp.eq.s32.totalorder %s19, 3
      %p63 = por %p61, %p62
      %p65 = scmp.ne.s32.totalorder %s50, %s64
      %p66 = scmp.eq.s32.totalorder %s19, 0
      %p67 = por %p65, %p66
      %s69 = sadd.s32 %s68, 1
      %p72 = scmp.eq.s32.totalorder %s13, 3
      %p73 = scmp.ne.s32.totalorder %s68, %s70
      %p74 = scmp.eq.s32.totalorder %s13, 0
      %p75 = por %p73, %p74
      %p76 = scmp.ne.s32.totalorder %s68, %s70
      %p77 = scmp.eq.s32.totalorder %s18, 3
      %p78 = por %p76, %p77
      %p79 = scmp.ne.s32.totalorder %s70, %s71
      %p80 = scmp.eq.s32.totalorder %s18, 0
      %p81 = por %p79, %p80
      %p82 = scmp.ne.s32.totalorder %s70, %s71
      %p83 = scmp.eq.s32.totalorder %s19, 3
      %p84 = por %p82, %p83
      %p86 = scmp.ne.s32.totalorder %s71, %s85
      %p87 = scmp.eq.s32.totalorder %s19, 0
      %p88 = por %p86, %p87
      %s89 = ssub.s32 %s13, %s20
      %p90 = scmp.eq.s32.totalorder %s89, 0
      %s92 = sadd.s32 %s91, 1
      %s93 = scalar_select %p90, %s91, %s92
      %p96 = pneg %p90
      %p97 = scmp.eq.s32.totalorder %s13, 3
      %p98 = por %p96, %p97
      %p99 = scmp.ne.s32.totalorder %s91, %s94
      %p100 = scmp.eq.s32.totalorder %s13, 0
      %p101 = por %p99, %p100
      %p102 = scmp.ne.s32.totalorder %s91, %s94
      %p103 = scmp.eq.s32.totalorder %s18, 3
      %p104 = por %p102, %p103
      %p105 = scmp.ne.s32.totalorder %s94, %s95
      %p106 = scmp.eq.s32.totalorder %s18, 0
      %p107 = por %p105, %p106
      %p108 = scmp.ne.s32.totalorder %s94, %s95
      %p109 = scmp.eq.s32.totalorder %s19, 3
      %p110 = por %p108, %p109
      %p112 = scmp.ne.s32.totalorder %s95, %s111
      %p113 = scmp.eq.s32.totalorder %s19, 0
      %p114 = por %p112, %p113
      %p115 = scmp.le.s32.totalorder 1, %s13
      %p116 = scmp.lt.s32.totalorder %s13, 5
      %p117 = pnand %p115, %p116
      %p118 = pneg %p117
      // Predicated region
      $region9: #{tpu_custom_call.1} parent=5 // pred_check
        _
      $region10: #{tpu_custom_call.1} parent=5 // pred_check_branch
        %120 = sbr.rel (%p117) target = $region12
      $region11: #{tpu_custom_call.1} parent=5 // pred_region
        %s121 = ssub.s32 %s13, 1
        // Predicated region
        $region13: #{tpu_custom_call.1} parent=11 // pred_check
          %p122 = pneg %p60
        $region14: #{tpu_custom_call.1} parent=11 // pred_check_branch
          %124 = sbr.rel (%p122) target = $region16
        $region15: #{tpu_custom_call.1} parent=11 // pred_region
          %126 = vsyncadd [#allocation3], 0
          %s127 = sshll.u32 %s1, 4
          %s128 = int_to_ptr.hbm [resolvable:$true] %s127
          %s129 = sshll.u32 [#allocation2], 4
          %s130 = int_to_ptr.vmem [resolvable:$true] %s129
          %135 = dma.hbm_to_vmem [thread:$0]  %s128, 512, %s130, [#allocation3], 128, 128, 8
        $region16: #{tpu_custom_call.1} parent=11 // pred_fallthru
          _
        // Predicated region
        $region17: #{tpu_custom_call.1} parent=11 // pred_check
          %p136 = pneg %p81
        $region18: #{tpu_custom_call.1} parent=11 // pred_check_branch
          %138 = sbr.rel (%p136) target = $region20
        $region19: #{tpu_custom_call.1} parent=11 // pred_region
          _
        $region20: #{tpu_custom_call.1} parent=11 // pred_fallthru
          _
      $region12: #{tpu_custom_call.1} parent=5 // pred_fallthru
        _
      %p139 = scmp.lt.s32.totalorder %s13, 4
      // Predicated region
      $region21: #{tpu_custom_call.1} parent=5 // pred_check
        %p140 = pneg %p139
      $region22: #{tpu_custom_call.1} parent=5 // pred_check_branch
        %142 = sbr.rel (%p140) target = $region24
      $region23: #{tpu_custom_call.1} parent=5 // pred_region
        // Predicated region
        $region25: #{tpu_custom_call.1} parent=23 // pred_check
          %p143 = pneg %p33
        $region26: #{tpu_custom_call.1} parent=23 // pred_check_branch
          %145 = sbr.rel (%p143) target = $region28
        $region27: #{tpu_custom_call.1} parent=23 // pred_region
          %p146 = scmp.lt.s32.totalorder %s13, 3
          %s147 = scalar_select %p146, %s13, 3
          %s148 = smul.addr %s147, 8
          %s149 = scalar_lea.vmem %s0, %s148
        $region28: #{tpu_custom_call.1} parent=23 // pred_fallthru
          _
      $region24: #{tpu_custom_call.1} parent=5 // pred_fallthru
        _
      %p150 = scmp.le.s32.totalorder 1, %s13
      %p151 = scmp.lt.s32.totalorder %s13, 5
      %p152 = pnand %p150, %p151
      %p153 = pneg %p152
      // Predicated region
      $region29: #{tpu_custom_call.1} parent=5 // pred_check
        _
      $region30: #{tpu_custom_call.1} parent=5 // pred_check_branch
        %155 = sbr.rel (%p152) target = $region32
      $region31: #{tpu_custom_call.1} parent=5 // pred_region
        %s156 = ssub.s32 %s13, 1
        // Predicated region
        $region33: #{tpu_custom_call.1} parent=31 // pred_check
          %p157 = pneg %p60
        $region34: #{tpu_custom_call.1} parent=31 // pred_check_branch
          %159 = sbr.rel (%p157) target = $region36
        $region35: #{tpu_custom_call.1} parent=31 // pred_region
          %161 = dma.done [#allocation3], 512
        $region36: #{tpu_custom_call.1} parent=31 // pred_fallthru
          _
        %p162 = scmp.lt.s32.totalorder %s18, 3
        %s163 = scalar_select %p162, %s18, 3
        %s164 = smul.addr %s163, 8
        %s165 = scalar_lea.vmem %s0, %s164
        %p166 = pneg %p39
        %p167 = pneg %p36
        %p168 = pneg %p60
        %p169 = pneg %p57
        %p170 = pneg %p81
        %p171 = pneg %p78
        %p172 = pneg %p107
        %p173 = pneg %p104
        %s174 = sand.u32 %s94, 1
        %s175 = scalar_lea.sflag [#allocation4], %s174
        %s176 = sand.u32 %s94, 1
        %s177 = smul.addr %s176, 8
        %s178 = scalar_lea.vmem [#allocation5], %s177
        %p179 = scmp.lt.s32.totalorder %s18, 3
        %s180 = scalar_select %p179, %s18, 3
        %s181 = smul.addr %s180, 8
        %s182 = scalar_lea.vmem %s0, %s181
        %v183 = vld [vmem:[%s182] sm:$0xff]
        %v184 = vld [vmem:[#allocation2] sm:$0xff]
        %v185 = vld [vmem:[#allocation2 + $0x8] sm:$0xff]
        %v186 = vld [vmem:[#allocation2 + $0x10] sm:$0xff]
        %v187 = vld [vmem:[#allocation2 + $0x18] sm:$0xff]
        %s188 = smul.u32 %s18, 8
        %s189 = scalar_lea.vmem %s2, %s188
        %v190 = vld [vmem:[%s189] sm:$0xff]
        %vm191 = vcmask 261120
        %v193 = vsel %vm191, %v183, 0
        %195 = vmatpush.msra.mxu0 0.0
        %196 = vmatpush.msra.mxu0 0.0
        %197 = vmatpush.msra.mxu0 0.0
        %198 = vmatpush.msra.mxu0 0.0
        %199 = vmatpush.msra.mxu0 0.0
        %200 = vmatpush.msra.mxu0 0.0
        %201 = vmatpush.msra.mxu0 0.0
        %202 = vmatpush.msra.mxu0 0.0
        %203 = vmatpush.msra.mxu0 0.0
        %204 = vmatpush.msra.mxu0 0.0
        %205 = vmatpush.msra.mxu0 0.0
        %206 = vmatpush.msra.mxu0 0.0
        %207 = vmatpush.msra.mxu0 %v187
        %208 = vmatpush.msra.mxu0 %v186
        %209 = vmatpush.msra.mxu0 %v185
        %210 = vmatpush.msra.mxu0 %v184
        %211 = vmatmul.f32.gmra.mxu0 %v193
        %v212 = vpop.f32.mrf.mxu0
        %v213 = vadd.f32 0.0, %v212
        %214 = vdwg.mxu0
        %v215 = vlaneseq
        %v216 = vand.u32 %v215, 127
        %vm217 = vcmp.lt.s32.totalorder %v216, 16
        %v218 = vsel %vm217, %v213, -1e+30
        %219 = vset.pattern.permute.xlu0 0
        %220 = vperm.xlu0 %219, %v190
        %v221 = vpop.permute.xlu0 %220
        %vm222 = vcmp.eq.s32.totalorder %v216, %v221
        %v223 = vsel %vm222, %v218, -1e+30
        %224 = vmax.xlane.f32.xlu0 %v223
        %v225 = vpop.xlane.xlu0 %224
        %226 = vmax.xlane.f32.xlu0 %v218
        %v227 = vpop.xlane.xlu0 %226
        %v228 = vsub.f32 %v218, %v227
        %v229 = vmul.f32 %v228, 1.442695
        %v230 = vpow.pop %v229
        %231 = vadd.xlane.f32.xlu0 %v230
        %v232 = vpop.xlane.xlu0 %231
        %v233 = vlog2.pop %v232
        %v234 = vmul.f32 %v233, 0.6931472
        %v235 = vadd.f32 %v227, %v234
        %v236 = vsub.f32 %v235, %v225
        %vm237 = vcmp.gt.f32.partialorder %v218, %v225
        %vm238 = vcmp.eq.f32.partialorder %v218, %v225
        %vm239 = vcmp.lt.s32.totalorder %v216, %v221
        %vm240 = vmand %vm238, %vm239
        %vm241 = vmor %vm237, %vm240
        %v242 = vsel %vm241, 1, 0
        %v243 = vcvt.s32.f32 %v242
        %244 = vadd.xlane.f32.xlu0 %v243
        %v245 = vpop.xlane.xlu0 %244
        %v246 = vlaneseq
        %v247 = vshrl.u32 %v246, 7
        %v248 = vstv %s188
        %v249 = vadd.s32 %v248, %v247
        %vm250 = vcmp.lt.s32.totalorder %v249, 28
        %v251 = vsel %vm250, 1, 0
        %v252 = vcvt.s32.f32 %v251
        %vm253 = vcmp.eq.s32.totalorder %v216, 0
        %v254 = vmul.f32 %v236, %v252
        %vm255 = vcmp.eq.s32.totalorder %v216, 1
        %vm256 = vcmp.lt.f32.partialorder %v245, 1.0
        %v257 = vsel %vm256, %v252, 0.0
        %vm258 = vcmp.eq.s32.totalorder %v216, 2
        %vm259 = vcmp.lt.f32.partialorder %v245, 5.0
        %v260 = vsel %vm259, %v252, 0.0
        %v261 = vsel %vm258, %v260, 0.0
        %v262 = vsel %vm255, %v257, %v261
        %v263 = vsel %vm253, %v254, %v262
        %v264 = vrot.slane %v263, 4
        %v265 = vadd.f32 %v263, %v264
        %v266 = vrot.slane %v265, 2
        %v267 = vadd.f32 %v265, %v266
        %v268 = vrot.slane %v267, 1
        %v269 = vadd.f32 %v267, %v268
        %270 = vst [vmem:[%s178] sm:$0xff] %v269
        %s271 = sand.u32 %s94, 1
        %s272 = scalar_lea.sflag [#allocation4], %s271
        %s273 = sand.u32 %s94, 1
        %s274 = smul.addr %s273, 8
        %s275 = scalar_lea.vmem [#allocation5], %s274
        // Predicated region
        $region37: #{tpu_custom_call.1} parent=31 // pred_check
          %p276 = pneg %p104
        $region38: #{tpu_custom_call.1} parent=31 // pred_check_branch
          %278 = sbr.rel (%p276) target = $region40
        $region39: #{tpu_custom_call.1} parent=31 // pred_region
          %280 = vsyncadd %s272, 0
          %s281 = smul.addr %s18, 8
          %s282 = scalar_lea.hbm %s3, %s281
          %s284 = sshll.u32 %s275, 4
          %s285 = int_to_ptr.vmem [resolvable:$true] %s284
          %s286 = sshll.u32 %s282, 4
          %s287 = int_to_ptr.hbm [resolvable:$true] %s286
          %289 = dma.vmem_to_hbm [thread:$0]  %s285, 128, %s287, %s272
        $region40: #{tpu_custom_call.1} parent=31 // pred_fallthru
          _
      $region32: #{tpu_custom_call.1} parent=5 // pred_fallthru
        _
      %p290 = scmp.le.s32.totalorder 2, %s13
      // Predicated region
      $region41: #{tpu_custom_call.1} parent=5 // pred_check
        %p291 = pneg %p290
      $region42: #{tpu_custom_call.1} parent=5 // pred_check_branch
        %293 = sbr.rel (%p291) target = $region44
      $region43: #{tpu_custom_call.1} parent=5 // pred_region
        %s294 = ssub.s32 %s13, 2
        // Predicated region
        $region45: #{tpu_custom_call.1} parent=43 // pred_check
          %p295 = pneg %p110
        $region46: #{tpu_custom_call.1} parent=43 // pred_check_branch
          %297 = sbr.rel (%p295) target = $region48
        $region47: #{tpu_custom_call.1} parent=43 // pred_region
          %s298 = sand.u32 %s95, 1
          %s299 = scalar_lea.sflag [#allocation4], %s298
          %s300 = sand.u32 %s95, 1
          %s301 = smul.addr %s300, 8
          %s302 = scalar_lea.vmem [#allocation5], %s301
          %304 = dma.done %s299, 128
        $region48: #{tpu_custom_call.1} parent=43 // pred_fallthru
          _
      $region44: #{tpu_custom_call.1} parent=5 // pred_fallthru
        _
    $region6: #{tpu_custom_call.1} parent=1 // loop_footer
      %s17 = sadd.s32 1, %s13
    $region7: #{tpu_custom_call.1} parent=1 // loop_footer_branch
      %12 = sbr.rel target = $region3
    $region8: #{tpu_custom_call.1} parent=1 // loop_exit
      _
    %305 = vsyncpa [#allocation3], 1
    %s306 = scalar_lea.sflag [#allocation3], 1
    %307 = vsyncpa %s306, 1
    %308 = vsyncpa [#allocation4], 1
    %s309 = scalar_lea.sflag [#allocation4], 1
    %310 = vsyncpa %s309, 1

</llo_original>
